<compile_context>
chip_gen: v7x
topology: tpu7x:2x2x1
jax: 0.10.0
libtpu: 0.0.40
codegen_flags: <defaults>
</compile_context>

<pallas_src>
import jax
import jax.numpy as jnp
from jax.experimental import pallas as pl
from jax.experimental.pallas import tpu as pltpu


def _round_up(x, m):
    return ((x + m - 1) // m) * m


def _tokenizer_kernel(xn_ref, xc_ref, w0_ref, wn_ref, ef_ref, o_ref):
    # Per batch tile of tb rows:
    #   xn_ref : (tb, d_numerical)            f32  numerical features
    #   xc_ref : (tb, n_cat)                  i32  pre-offset flat one-hot indices
    #   w0_ref : (1, n_flat)                  f32  CLS*weight[0] + flattened bias
    #   wn_ref : (d_numerical, n_flat)        f32  weight[t] placed at token t's slot
    #   ef_ref : (n_cat * n_vocab, n_flat)    f32  embedding table placed per cat slot
    #   o_ref  : (tb, n_flat)                 f32  flattened output tile
    tb = xn_ref.shape[0]
    n_cat = xc_ref.shape[1]
    n_onehot, n_flat = ef_ref.shape

    # One-hot over all categorical columns stacked along K: (tb, n_cat * n_vocab).
    # Column blocks are disjoint (indices already include c * n_vocab), so a sum of
    # per-column compares builds the full one-hot with pure VPU work.
    idx = xc_ref[...]                                                    # (tb, n_cat)
    lane = jax.lax.broadcasted_iota(jnp.int32, (tb, n_onehot), 1)
    onehot = jnp.zeros((tb, n_onehot), jnp.float32)
    for c in range(n_cat):                                               # small, static
        onehot = onehot + (lane == idx[:, c:c + 1]).astype(jnp.float32)

    acc = jnp.broadcast_to(w0_ref[...], (tb, n_flat))                    # CLS + bias rows
    acc = acc + jnp.dot(xn_ref[...], wn_ref[...],
                        preferred_element_type=jnp.float32)              # numerical tokens
    acc = acc + jnp.dot(onehot, ef_ref[...],
                        preferred_element_type=jnp.float32)              # categorical tokens
    o_ref[...] = acc                                                     # single dense store


def tokenizer_forward(x_num, x_cat, weight, cat_embeddings, category_offsets,
                      bias, *, block_b=1024):
    """Pallas TPU forward of tabsyn's Tokenizer.

    x_num            : (B, d_numerical) float
    x_cat            : (B, n_cat) int   (per-column codes, before offset add)
    weight           : (d_numerical + 1, d_token)
    cat_embeddings   : (sum(categories), d_token)
    category_offsets : (n_cat,) int
    bias             : (d_numerical + n_cat, d_token) or None
    returns          : (B, 1 + d_numerical + n_cat, d_token) float32
    """
    assert x_num is not None and x_cat is not None
    # TODO(synk): the categories=None / x_num=None module variants are not wired up;
    # this covers the full (numerical + categorical) path used by tabsyn's VAE.

    B, d_numerical = x_num.shape
    n_cat = x_cat.shape[1]
    n_vocab, d_token = cat_embeddings.shape
    n_tokens = 1 + d_numerical + n_cat
    n_flat = n_tokens * d_token
    f32 = jnp.float32

    weight = weight.astype(f32)
    cat_embeddings = cat_embeddings.astype(f32)

    # Flattened bias with a leading zero row for the CLS token.
    if bias is None:
        bias_full = jnp.zeros((n_tokens, d_token), f32)
    else:
        bias_full = jnp.concatenate(
            [jnp.zeros((1, d_token), f32), bias.astype(f32)], axis=0)

    # W_flat[t, t*d_token + d] = weight[t, d]; zeros elsewhere.
    eye_num = jnp.eye(n_tokens, dtype=f32)[: d_numerical + 1]            # (d_num+1, n_tok)
    w_flat = jnp.einsum("nt,nd->ntd", eye_num, weight).reshape(d_numerical + 1, n_flat)
    w0_flat = w_flat[0:1] + bias_full.reshape(1, n_flat)                 # CLS row + bias
    wn_flat = w_flat[1:]                                                 # numerical rows

    # E_flat[c*n_vocab + v, (1+d_num+c)*d_token + d] = emb[v, d]; zeros elsewhere.
    eye_cat = jnp.eye(n_tokens, dtype=f32)[1 + d_numerical:]             # (n_cat, n_tok)
    e_flat = jnp.einsum("ct,vd->cvtd", eye_cat, cat_embeddings).reshape(
        n_cat * n_vocab, n_flat)

    # Fold category offsets AND per-column one-hot block offsets into x_cat.
    col_base = jnp.arange(n_cat, dtype=jnp.int32) * n_vocab
    xc_idx = (x_cat.astype(jnp.int32)
              + category_offsets.astype(jnp.int32)[None, :]
              + col_base[None, :])
    x_num = x_num.astype(f32)

    # Batch tile: as large as possible; multiple of 8 when tiled; keep >= 4 grid
    # steps for large B so v7x's two TensorCores both get work.
    if B <= block_b:
        tb = B
    else:
        tb = max(8, (block_b // 8) * 8)
        tb = min(tb, max(8, _round_up(pl.cdiv(B, 4), 8)))
    grid = (pl.cdiv(B, tb),)

    cost = pl.CostEstimate(
        flops=int(2 * B * d_numerical * n_flat          # numerical matmul
                  + 2 * B * n_cat * n_vocab * n_flat    # one-hot matmul
                  + 2 * B * n_flat),                    # adds
        transcendentals=0,
        bytes_accessed=int(4 * (B * d_numerical + B * n_cat
                                + (d_numerical + 1) * n_flat
                                + n_cat * n_vocab * n_flat
                                + B * n_flat)),
    )

    out_flat = pl.pallas_call(
        _tokenizer_kernel,
        out_shape=jax.ShapeDtypeStruct((B, n_flat), f32),
        grid=grid,
        in_specs=[
            pl.BlockSpec((tb, d_numerical), lambda i: (i, 0)),
            pl.BlockSpec((tb, n_cat), lambda i: (i, 0)),
            # Small parameters: same block every step -> resident in VMEM.
            pl.BlockSpec((1, n_flat), lambda i: (0, 0)),
            pl.BlockSpec((d_numerical, n_flat), lambda i: (0, 0)),
            pl.BlockSpec((n_cat * n_vocab, n_flat), lambda i: (0, 0)),
        ],
        out_specs=pl.BlockSpec((tb, n_flat), lambda i: (i, 0)),
        compiler_params=pltpu.CompilerParams(dimension_semantics=("parallel",)),
        cost_estimate=cost,
    )(x_num, xc_idx, w0_flat, wn_flat, e_flat)

    return out_flat.reshape(B, n_tokens, d_token)


def _reference(x_num, x_cat, weight, cat_embeddings, category_offsets, bias):
    B = x_num.shape[0]
    d_token = weight.shape[1]
    xn = jnp.concatenate(
        [jnp.ones((B, 1), jnp.float32), x_num.astype(jnp.float32)], axis=1)
    x = weight[None] * xn[:, :, None]
    idx = x_cat + category_offsets[None]
    cat = cat_embeddings[idx]                        # (B, n_cat, d_token)
    x = jnp.concatenate([x, cat], axis=1)
    if bias is not None:
        bias_full = jnp.concatenate(
            [jnp.zeros((1, d_token), bias.dtype), bias], axis=0)
        x = x + bias_full[None]
    return x


if __name__ == "__main__":
    key = jax.random.PRNGKey(0)
    k1, k2, k3, k4, k5 = jax.random.split(key, 5)

    B = 16
    d_numerical = 3
    categories = [3, 5, 7]
    d_token = 32
    n_cat = len(categories)
    n_vocab = sum(categories)
    d_bias = d_numerical + n_cat
    n_tokens = 1 + d_numerical + n_cat

    x_num = jax.random.normal(k1, (B, d_numerical), dtype=jnp.float32)
    x_cat = jax.random.randint(k2, (B, n_cat), 0, jnp.array(categories, jnp.int32))
    weight = jax.random.normal(k3, (d_numerical + 1, d_token), dtype=jnp.float32) * 0.1
    cat_emb = jax.random.normal(k4, (n_vocab, d_token), dtype=jnp.float32) * 0.1
    bias = jax.random.normal(k5, (d_bias, d_token), dtype=jnp.float32) * 0.1
    category_offsets = jnp.cumsum(jnp.array([0] + categories[:-1], dtype=jnp.int32))

    # Case 1: 2 full batch tiles (grid of 2).
    out = tokenizer_forward(x_num, x_cat, weight, cat_emb, category_offsets,
                            bias, block_b=8)
    out = jax.block_until_ready(out)
    ref = _reference(x_num, x_cat, weight, cat_emb, category_offsets, bias)
    assert out.shape == (B, n_tokens, d_token), out.shape
    assert jnp.allclose(out, ref, atol=1e-5, rtol=1e-5), \
        float(jnp.max(jnp.abs(out - ref)))

    # Case 2: single grid step (tb == B) with the default large block_b.
    out1 = jax.block_until_ready(
        tokenizer_forward(x_num, x_cat, weight, cat_emb, category_offsets, bias))
    assert jnp.allclose(out1, ref, atol=1e-5, rtol=1e-5), \
        float(jnp.max(jnp.abs(out1 - ref)))

    # Case 3: ragged batch (B % tb != 0) -> last output block is partially masked.
    B2 = 13
    out2 = jax.block_until_ready(
        tokenizer_forward(x_num[:B2], x_cat[:B2], weight, cat_emb,
                          category_offsets, bias, block_b=8))
    ref2 = _reference(x_num[:B2], x_cat[:B2], weight, cat_emb, category_offsets, bias)
    assert out2.shape == (B2, n_tokens, d_token), out2.shape
    assert jnp.allclose(out2, ref2, atol=1e-5, rtol=1e-5), \
        float(jnp.max(jnp.abs(out2 - ref2)))

    print("KERNEL_OK")
</pallas_src>

<mosaic_0001>
module attributes {stable_mosaic.version = 11 : i64} {
  func.func @_tokenizer_kernel(%arg0: i32, %arg1: memref<8x3xf32, #tpu.memory_space<vmem>>, %arg2: memref<8x3xi32, #tpu.memory_space<vmem>>, %arg3: memref<1x224xf32, #tpu.memory_space<vmem>>, %arg4: memref<3x224xf32, #tpu.memory_space<vmem>>, %arg5: memref<45x224xf32, #tpu.memory_space<vmem>>, %arg6: memref<8x224xf32, #tpu.memory_space<vmem>>) attributes {dimension_semantics = [#tpu.dimension_semantics<parallel>], iteration_bounds = array<i64: 2>, scalar_prefetch = 0 : i64, scratch_operands = 0 : i64, tpu.core_type = #tpu.core_type<tc>, window_params = [{transform_indices = @transform_0, window_bounds = array<i64: 8, 3>}, {transform_indices = @transform_1, window_bounds = array<i64: 8, 3>}, {pipeline_mode = #tpu.pipeline_mode<synchronous>, transform_indices = @transform_2, window_bounds = array<i64: 1, 224>}, {pipeline_mode = #tpu.pipeline_mode<synchronous>, transform_indices = @transform_3, window_bounds = array<i64: 3, 224>}, {pipeline_mode = #tpu.pipeline_mode<synchronous>, transform_indices = @transform_4, window_bounds = array<i64: 45, 224>}, {transform_indices = @transform_5, window_bounds = array<i64: 8, 224>}]} {
    %c0 = arith.constant 0 : index
    %c0_0 = arith.constant 0 : index
    %0 = vector.load %arg2[%c0, %c0_0] : memref<8x3xi32, #tpu.memory_space<vmem>>, vector<8x3xi32>
    %1 = tpu.iota {dimensions = array<i32: 1>} : vector<8x45xi32>
    %cst = arith.constant 0.000000e+00 : f32
    %2 = vector.broadcast %cst : f32 to vector<8x45xf32>
    %3 = vector.extract_strided_slice %0 {offsets = [0, 0], sizes = [8, 1], strides = [1, 1]} : vector<8x3xi32> to vector<8x1xi32>
    %4 = vector.broadcast %3 : vector<8x1xi32> to vector<8x45xi32>
    %5 = arith.cmpi eq, %1, %4 : vector<8x45xi32>
    %6 = arith.extui %5 : vector<8x45xi1> to vector<8x45xi32>
    %7 = arith.sitofp %6 : vector<8x45xi32> to vector<8x45xf32>
    %8 = arith.addf %2, %7 : vector<8x45xf32>
    %9 = vector.extract_strided_slice %0 {offsets = [0, 1], sizes = [8, 1], strides = [1, 1]} : vector<8x3xi32> to vector<8x1xi32>
    %10 = vector.broadcast %9 : vector<8x1xi32> to vector<8x45xi32>
    %11 = arith.cmpi eq, %1, %10 : vector<8x45xi32>
    %12 = arith.extui %11 : vector<8x45xi1> to vector<8x45xi32>
    %13 = arith.sitofp %12 : vector<8x45xi32> to vector<8x45xf32>
    %14 = arith.addf %8, %13 : vector<8x45xf32>
    %15 = vector.extract_strided_slice %0 {offsets = [0, 2], sizes = [8, 1], strides = [1, 1]} : vector<8x3xi32> to vector<8x1xi32>
    %16 = vector.broadcast %15 : vector<8x1xi32> to vector<8x45xi32>
    %17 = arith.cmpi eq, %1, %16 : vector<8x45xi32>
    %18 = arith.extui %17 : vector<8x45xi1> to vector<8x45xi32>
    %19 = arith.sitofp %18 : vector<8x45xi32> to vector<8x45xf32>
    %20 = arith.addf %14, %19 : vector<8x45xf32>
    %c0_1 = arith.constant 0 : index
    %c0_2 = arith.constant 0 : index
    %21 = vector.load %arg3[%c0_1, %c0_2] : memref<1x224xf32, #tpu.memory_space<vmem>>, vector<1x224xf32>
    %22 = vector.shape_cast %21 : vector<1x224xf32> to vector<1x224xf32>
    %23 = vector.broadcast %22 : vector<1x224xf32> to vector<8x224xf32>
    %c0_3 = arith.constant 0 : index
    %c0_4 = arith.constant 0 : index
    %24 = vector.load %arg1[%c0_3, %c0_4] : memref<8x3xf32, #tpu.memory_space<vmem>>, vector<8x3xf32>
    %c0_5 = arith.constant 0 : index
    %c0_6 = arith.constant 0 : index
    %25 = vector.load %arg4[%c0_5, %c0_6] : memref<3x224xf32, #tpu.memory_space<vmem>>, vector<3x224xf32>
    %cst_7 = arith.constant dense<0.000000e+00> : vector<8x224xf32>
    %26 = tpu.matmul %24, %25, %cst_7 {dimension_numbers = #tpu.dot_dimension_numbers<[1], [0], [0], [1], [0, 0, 1, 1], [], []>} : vector<8x3xf32>, vector<3x224xf32>, vector<8x224xf32> -> vector<8x224xf32>
    %27 = arith.addf %23, %26 : vector<8x224xf32>
    %c0_8 = arith.constant 0 : index
    %c0_9 = arith.constant 0 : index
    %28 = vector.load %arg5[%c0_8, %c0_9] : memref<45x224xf32, #tpu.memory_space<vmem>>, vector<45x224xf32>
    %cst_10 = arith.constant dense<0.000000e+00> : vector<8x224xf32>
    %29 = tpu.matmul %20, %28, %cst_10 {dimension_numbers = #tpu.dot_dimension_numbers<[1], [0], [0], [1], [0, 0, 1, 1], [], []>} : vector<8x45xf32>, vector<45x224xf32>, vector<8x224xf32> -> vector<8x224xf32>
    %30 = arith.addf %27, %29 : vector<8x224xf32>
    %c0_11 = arith.constant 0 : index
    %c0_12 = arith.constant 0 : index
    %31 = vector.load %arg6[%c0_11, %c0_12] : memref<8x224xf32, #tpu.memory_space<vmem>>, vector<8x224xf32>
    tpu.vector_store %arg6[%c0_11, %c0_12], %30 {strides = array<i32>} : memref<8x224xf32, #tpu.memory_space<vmem>>, vector<8x224xf32>,
    return
  }
  func.func @transform_0(%arg0: i32) -> (i32, i32) {
    %c0_i32 = arith.constant 0 : i32
    %c0_i32_0 = arith.constant 0 : i32
    return %arg0, %c0_i32 : i32, i32
  }
  func.func @transform_1(%arg0: i32) -> (i32, i32) {
    %c0_i32 = arith.constant 0 : i32
    %c0_i32_0 = arith.constant 0 : i32
    return %arg0, %c0_i32 : i32, i32
  }
  func.func @transform_2(%arg0: i32) -> (i32, i32) {
    %c0_i32 = arith.constant 0 : i32
    %c0_i32_0 = arith.constant 0 : i32
    %c0_i32_1 = arith.constant 0 : i32
    return %c0_i32, %c0_i32_0 : i32, i32
  }
  func.func @transform_3(%arg0: i32) -> (i32, i32) {
    %c0_i32 = arith.constant 0 : i32
    %c0_i32_0 = arith.constant 0 : i32
    %c0_i32_1 = arith.constant 0 : i32
    return %c0_i32, %c0_i32_0 : i32, i32
  }
  func.func @transform_4(%arg0: i32) -> (i32, i32) {
    %c0_i32 = arith.constant 0 : i32
    %c0_i32_0 = arith.constant 0 : i32
    %c0_i32_1 = arith.constant 0 : i32
    return %c0_i32, %c0_i32_0 : i32, i32
  }
  func.func @transform_5(%arg0: i32) -> (i32, i32) {
    %c0_i32 = arith.constant 0 : i32
    %c0_i32_0 = arith.constant 0 : i32
    return %arg0, %c0_i32 : i32, i32
  }
}

</mosaic_0001>

<llo_original>
// kernel: tpu_custom_call.1
$region0: #{tpu_custom_call.1}
  #allocation0 [shape = 'u32[]', space=smem, size = 0x4, offset = 0x4, fixed_abs, tag = 'smem constant byte address 0x4 - core index']
  #allocation1 [shape = 'u32[144,128]{1,0:T(1,128)}', space=vmem, size = 0x12000, scoped, tag = 'internal scratch']
  %s0 = inlined_call_operand.vmem [shape: f32[16,3], index: 0, kind: input, shape index: {}]
  %s1 = inlined_call_operand.vmem [shape: s32[16,3], index: 1, kind: input, shape index: {}]
  %s2 = inlined_call_operand.vmem [shape: f32[1,224], index: 2, kind: input, shape index: {}]
  %s3 = inlined_call_operand.vmem [shape: f32[3,224], index: 3, kind: input, shape index: {}]
  %s4 = inlined_call_operand.hbm [shape: f32[45,224], index: 4, kind: input, shape index: {}]
  %s5 = inlined_call_operand.hbm [shape: f32[16,224], index: 5, kind: output, shape index: {}]
  %s6 = sld [smem:[#allocation0]]
  $region57: #{tpu_custom_call.1} parent=0
    _
  %s8 = ssub.s32 1, %s6
  %s9 = scalar_select 0, %s8, %s6
  $region1: #{tpu_custom_call.1} parent=0
    #allocation2 [shape = 'u8[49152]{0}', space=vmem, size = 0xc000, scoped, tag = 'input window, operand 4, single buffered']
    #allocation3 [shape = 's32[2]{0}', space=sflag, size = 0x8, scoped, tag = 'scoped memory for tpu_custom_call.1']
    #allocation4 [shape = 's32[2]{0}', space=sflag, size = 0x8, scoped, tag = 'scoped memory for tpu_custom_call.1']
    #allocation5 [shape = 'u8[16384]{0}', space=vmem, size = 0x4000, scoped, tag = 'output window, operand 0']
    %10 = vsyncpa [#allocation3], 0
    %11 = vsyncpa [#allocation4], 0
    %s12 = scalar_lea.sflag [#allocation4], 1
    %13 = vsyncpa %s12, 0
    loop: start=0, step=1, limit=4
    $region2: #{tpu_custom_call.1} parent=1 // loop_pre_header
      _
    $region3: #{tpu_custom_call.1} parent=1 // loop_header
      %s15 = sphi 0, %s19
      %p16 = scmp.ge.s32.totalorder %s15, 4
      %s25 = sphi 0, %s27
      %s28 = sphi 0, %s25
      %s29 = sphi 0, %s28
      %s45 = sphi 0, %s29
      %s51 = sphi 0, %s53
      %s54 = sphi 0, %s51
      %s55 = sphi 0, %s54
      %s71 = sphi 0, %s55
      %s75 = sphi 0, %s75
      %s77 = sphi 0, %s75
      %s78 = sphi 0, %s77
      %s92 = sphi 0, %s78
      %s96 = sphi 0, %s96
      %s98 = sphi 0, %s96
      %s99 = sphi 0, %s98
      %s113 = sphi 0, %s99
      %s117 = sphi 0, %s117
      %s119 = sphi 0, %s117
      %s120 = sphi 0, %s119
      %s134 = sphi 0, %s120
      %s140 = sphi 0, %s142
      %s143 = sphi 0, %s140
      %s144 = sphi 0, %s143
      %s160 = sphi 0, %s144
    $region4: #{tpu_custom_call.1} parent=1 // loop_header_branch
      %18 = sbr.rel (%p16) target = $region8
    $region5: #{tpu_custom_call.1} parent=1 // loop_body
      %s20 = ssub.s32 %s15, 1
      %s21 = ssub.s32 %s15, 2
      %s22 = sadd.s32 %s15, 1
      %s23 = ssub.s32 %s15, %s22
      %p24 = scmp.eq.s32.totalorder %s23, 0
      %s26 = sadd.s32 %s25, 1
      %s27 = scalar_select %p24, %s25, %s26
      %p30 = pneg %p24
      %p31 = scmp.eq.s32.totalorder %s15, 1
      %p32 = por %p30, %p31
      %p33 = scmp.ne.s32.totalorder %s25, %s28
      %p34 = scmp.eq.s32.totalorder %s15, 0
      %p35 = por %p33, %p34
      %p36 = scmp.ne.s32.totalorder %s25, %s28
      %p37 = scmp.eq.s32.totalorder %s20, 1
      %p38 = por %p36, %p37
      %p39 = scmp.ne.s32.totalorder %s28, %s29
      %p40 = scmp.eq.s32.totalorder %s20, 0
      %p41 = por %p39, %p40
      %p42 = scmp.ne.s32.totalorder %s28, %s29
      %p43 = scmp.eq.s32.totalorder %s21, 1
      %p44 = por %p42, %p43
      %p46 = scmp.ne.s32.totalorder %s29, %s45
      %p47 = scmp.eq.s32.totalorder %s21, 0
      %p48 = por %p46, %p47
      %s49 = ssub.s32 %s15, %s22
      %p50 = scmp.eq.s32.totalorder %s49, 0
      %s52 = sadd.s32 %s51, 1
      %s53 = scalar_select %p50, %s51, %s52
      %p56 = pneg %p50
      %p57 = scmp.eq.s32.totalorder %s15, 1
      %p58 = por %p56, %p57
      %p59 = scmp.ne.s32.totalorder %s51, %s54
      %p60 = scmp.eq.s32.totalorder %s15, 0
      %p61 = por %p59, %p60
      %p62 = scmp.ne.s32.totalorder %s51, %s54
      %p63 = scmp.eq.s32.totalorder %s20, 1
      %p64 = por %p62, %p63
      %p65 = scmp.ne.s32.totalorder %s54, %s55
      %p66 = scmp.eq.s32.totalorder %s20, 0
      %p67 = por %p65, %p66
      %p68 = scmp.ne.s32.totalorder %s54, %s55
      %p69 = scmp.eq.s32.totalorder %s21, 1
      %p70 = por %p68, %p69
      %p72 = scmp.ne.s32.totalorder %s55, %s71
      %p73 = scmp.eq.s32.totalorder %s21, 0
      %p74 = por %p72, %p73
      %s76 = sadd.s32 %s75, 1
      %p79 = scmp.eq.s32.totalorder %s15, 1
      %p80 = scmp.ne.s32.totalorder %s75, %s77
      %p81 = scmp.eq.s32.totalorder %s15, 0
      %p82 = por %p80, %p81
      %p83 = scmp.ne.s32.totalorder %s75, %s77
      %p84 = scmp.eq.s32.totalorder %s20, 1
      %p85 = por %p83, %p84
      %p86 = scmp.ne.s32.totalorder %s77, %s78
      %p87 = scmp.eq.s32.totalorder %s20, 0
      %p88 = por %p86, %p87
      %p89 = scmp.ne.s32.totalorder %s77, %s78
      %p90 = scmp.eq.s32.totalorder %s21, 1
      %p91 = por %p89, %p90
      %p93 = scmp.ne.s32.totalorder %s78, %s92
      %p94 = scmp.eq.s32.totalorder %s21, 0
      %p95 = por %p93, %p94
      %s97 = sadd.s32 %s96, 1
      %p100 = scmp.eq.s32.totalorder %s15, 1
      %p101 = scmp.ne.s32.totalorder %s96, %s98
      %p102 = scmp.eq.s32.totalorder %s15, 0
      %p103 = por %p101, %p102
      %p104 = scmp.ne.s32.totalorder %s96, %s98
      %p105 = scmp.eq.s32.totalorder %s20, 1
      %p106 = por %p104, %p105
      %p107 = scmp.ne.s32.totalorder %s98, %s99
      %p108 = scmp.eq.s32.totalorder %s20, 0
      %p109 = por %p107, %p108
      %p110 = scmp.ne.s32.totalorder %s98, %s99
      %p111 = scmp.eq.s32.totalorder %s21, 1
      %p112 = por %p110, %p111
      %p114 = scmp.ne.s32.totalorder %s99, %s113
      %p115 = scmp.eq.s32.totalorder %s21, 0
      %p116 = por %p114, %p115
      %s118 = sadd.s32 %s117, 1
      %p121 = scmp.eq.s32.totalorder %s15, 1
      %p122 = scmp.ne.s32.totalorder %s117, %s119
      %p123 = scmp.eq.s32.totalorder %s15, 0
      %p124 = por %p122, %p123
      %p125 = scmp.ne.s32.totalorder %s117, %s119
      %p126 = scmp.eq.s32.totalorder %s20, 1
      %p127 = por %p125, %p126
      %p128 = scmp.ne.s32.totalorder %s119, %s120
      %p129 = scmp.eq.s32.totalorder %s20, 0
      %p130 = por %p128, %p129
      %p131 = scmp.ne.s32.totalorder %s119, %s120
      %p132 = scmp.eq.s32.totalorder %s21, 1
      %p133 = por %p131, %p132
      %p135 = scmp.ne.s32.totalorder %s120, %s134
      %p136 = scmp.eq.s32.totalorder %s21, 0
      %p137 = por %p135, %p136
      %s138 = ssub.s32 %s15, %s22
      %p139 = scmp.eq.s32.totalorder %s138, 0
      %s141 = sadd.s32 %s140, 1
      %s142 = scalar_select %p139, %s140, %s141
      %p145 = pneg %p139
      %p146 = scmp.eq.s32.totalorder %s15, 1
      %p147 = por %p145, %p146
      %p148 = scmp.ne.s32.totalorder %s140, %s143
      %p149 = scmp.eq.s32.totalorder %s15, 0
      %p150 = por %p148, %p149
      %p151 = scmp.ne.s32.totalorder %s140, %s143
      %p152 = scmp.eq.s32.totalorder %s20, 1
      %p153 = por %p151, %p152
      %p154 = scmp.ne.s32.totalorder %s143, %s144
      %p155 = scmp.eq.s32.totalorder %s20, 0
      %p156 = por %p154, %p155
      %p157 = scmp.ne.s32.totalorder %s143, %s144
      %p158 = scmp.eq.s32.totalorder %s21, 1
      %p159 = por %p157, %p158
      %p161 = scmp.ne.s32.totalorder %s144, %s160
      %p162 = scmp.eq.s32.totalorder %s21, 0
      %p163 = por %p161, %p162
      %p164 = scmp.le.s32.totalorder 1, %s15
      %p165 = scmp.lt.s32.totalorder %s15, 3
      %p166 = pnand %p164, %p165
      %p167 = pneg %p166
      // Predicated region
      $region9: #{tpu_custom_call.1} parent=5 // pred_check
        _
      $region10: #{tpu_custom_call.1} parent=5 // pred_check_branch
        %169 = sbr.rel (%p166) target = $region12
      $region11: #{tpu_custom_call.1} parent=5 // pred_region
        %s170 = ssub.s32 %s15, 1
        // Predicated region
        $region13: #{tpu_custom_call.1} parent=11 // pred_check
          %p171 = pneg %p88
        $region14: #{tpu_custom_call.1} parent=11 // pred_check_branch
          %173 = sbr.rel (%p171) target = $region16
        $region15: #{tpu_custom_call.1} parent=11 // pred_region
          _
        $region16: #{tpu_custom_call.1} parent=11 // pred_fallthru
          _
        // Predicated region
        $region17: #{tpu_custom_call.1} parent=11 // pred_check
          %p174 = pneg %p109
        $region18: #{tpu_custom_call.1} parent=11 // pred_check_branch
          %176 = sbr.rel (%p174) target = $region20
        $region19: #{tpu_custom_call.1} parent=11 // pred_region
          _
        $region20: #{tpu_custom_call.1} parent=11 // pred_fallthru
          _
        // Predicated region
        $region21: #{tpu_custom_call.1} parent=11 // pred_check
          %p177 = pneg %p130
        $region22: #{tpu_custom_call.1} parent=11 // pred_check_branch
          %179 = sbr.rel (%p177) target = $region24
        $region23: #{tpu_custom_call.1} parent=11 // pred_region
          %s181 = ssub.s32 1536, 1536
          %182 = vsyncadd [#allocation3], %s181
          %s183 = sshll.u32 [#allocation2], 4
          %s184 = int_to_ptr.vmem [resolvable:$true] %s183
          %189 = dma.hbm_to_vmem [thread:$0]  %s4, 1536, %s184, [#allocation3], 256, 256, 16
        $region24: #{tpu_custom_call.1} parent=11 // pred_fallthru
          _
      $region12: #{tpu_custom_call.1} parent=5 // pred_fallthru
        _
      %p190 = scmp.lt.s32.totalorder %s15, 2
      // Predicated region
      $region25: #{tpu_custom_call.1} parent=5 // pred_check
        %p191 = pneg %p190
      $region26: #{tpu_custom_call.1} parent=5 // pred_check_branch
        %193 = sbr.rel (%p191) target = $region28
      $region27: #{tpu_custom_call.1} parent=5 // pred_region
        // Predicated region
        $region29: #{tpu_custom_call.1} parent=27 // pred_check
          %p194 = pneg %p35
        $region30: #{tpu_custom_call.1} parent=27 // pred_check_branch
          %196 = sbr.rel (%p194) target = $region32
        $region31: #{tpu_custom_call.1} parent=27 // pred_region
          %p197 = scmp.lt.s32.totalorder %s15, 1
          %s198 = scalar_select %p197, %s15, 1
          %s199 = smul.addr %s198, 8
          %s200 = scalar_lea.vmem %s0, %s199
        $region32: #{tpu_custom_call.1} parent=27 // pred_fallthru
          _
        // Predicated region
        $region33: #{tpu_custom_call.1} parent=27 // pred_check
          %p201 = pneg %p61
        $region34: #{tpu_custom_call.1} parent=27 // pred_check_branch
          %203 = sbr.rel (%p201) target = $region36
        $region35: #{tpu_custom_call.1} parent=27 // pred_region
          %p204 = scmp.lt.s32.totalorder %s15, 1
          %s205 = scalar_select %p204, %s15, 1
          %s206 = smul.addr %s205, 8
          %s207 = scalar_lea.vmem %s1, %s206
        $region36: #{tpu_custom_call.1} parent=27 // pred_fallthru
          _
      $region28: #{tpu_custom_call.1} parent=5 // pred_fallthru
        _
      %p208 = scmp.le.s32.totalorder 1, %s15
      %p209 = scmp.lt.s32.totalorder %s15, 3
      %p210 = pnand %p208, %p209
      %p211 = pneg %p210
      // Predicated region
      $region37: #{tpu_custom_call.1} parent=5 // pred_check
        _
      $region38: #{tpu_custom_call.1} parent=5 // pred_check_branch
        %213 = sbr.rel (%p210) target = $region40
      $region39: #{tpu_custom_call.1} parent=5 // pred_region
        %s214 = ssub.s32 %s15, 1
        // Predicated region
        $region41: #{tpu_custom_call.1} parent=39 // pred_check
          %p215 = pneg %p130
        $region42: #{tpu_custom_call.1} parent=39 // pred_check_branch
          %217 = sbr.rel (%p215) target = $region44
        $region43: #{tpu_custom_call.1} parent=39 // pred_region
          %218 = dma.done [#allocation3], 1536
        $region44: #{tpu_custom_call.1} parent=39 // pred_fallthru
          _
        %p219 = scmp.lt.s32.totalorder %s20, 1
        %s220 = scalar_select %p219, %s20, 1
        %s221 = smul.addr %s220, 8
        %s222 = scalar_lea.vmem %s0, %s221
        %p223 = pneg %p41
        %p224 = pneg %p38
        %p225 = scmp.lt.s32.totalorder %s20, 1
        %s226 = scalar_select %p225, %s20, 1
        %s227 = smul.addr %s226, 8
        %s228 = scalar_lea.vmem %s1, %s227
        %p229 = pneg %p67
        %p230 = pneg %p64
        %p231 = pneg %p88
        %p232 = pneg %p85
        %p233 = pneg %p109
        %p234 = pneg %p106
        %p235 = pneg %p130
        %p236 = pneg %p127
        %p237 = pneg %p156
        %p238 = pneg %p153
        %s239 = sand.u32 %s143, 1
        %s240 = scalar_lea.sflag [#allocation4], %s239
        %s241 = sand.u32 %s143, 1
        %s242 = smul.addr %s241, 16
        %s243 = scalar_lea.vmem [#allocation5], %s242
        %p244 = scmp.lt.s32.totalorder %s20, 1
        %s245 = scalar_select %p244, %s20, 1
        %s246 = smul.addr %s245, 8
        %s247 = scalar_lea.vmem %s0, %s246
        %p248 = scmp.lt.s32.totalorder %s20, 1
        %s249 = scalar_select %p248, %s20, 1
        %s250 = smul.addr %s249, 8
        %s251 = scalar_lea.vmem %s1, %s250
        %v252 = vld [vmem:[%s251] sm:$0xff]
        %v253 = vlaneseq
        %v254 = vand.u32 %v253, 127
        %255 = vset.pattern.permute.xlu0 0
        %256 = vperm.xlu0 %255, %v252
        %v257 = vpop.permute.xlu0 %256
        %vm258 = vcmp.eq.s32.totalorder %v254, %v257
        %v259 = vsel %vm258, 1, 0
        %v260 = vcvt.s32.f32 %v259
        %v261 = vadd.f32 %v260, 0.0
        %262 = vset.pattern.permute.xlu0 1
        %263 = vperm.xlu0 %262, %v252
        %v264 = vpop.permute.xlu0 %263
        %vm265 = vcmp.eq.s32.totalorder %v254, %v264
        %v266 = vsel %vm265, 1, 0
        %v267 = vcvt.s32.f32 %v266
        %v268 = vadd.f32 %v261, %v267
        %269 = vset.pattern.permute.xlu0 2
        %270 = vperm.xlu0 %269, %v252
        %v271 = vpop.permute.xlu0 %270
        %vm272 = vcmp.eq.s32.totalorder %v254, %v271
        %v273 = vsel %vm272, 1, 0
        %v274 = vcvt.s32.f32 %v273
        %v275 = vadd.f32 %v268, %v274
        %v276 = vld [vmem:[%s2] sm:$0x3]
        %v278 = vlaneseq
        %v279 = vshrl.u32 %v278, 7
        %v280 = vsub.s32 0, %v279
        %v281 = vrot.slane %v276, %v280
        %v282 = vlaneseq
        %v283 = vshrl.u32 %v282, 7
        %v284 = vsub.s32 1, %v283
        %v285 = vrot.slane %v276, %v284
        %v288 = vld [vmem:[%s247] sm:$0xff]
        %v289 = vld [vmem:[%s3] sm:$0x77]
        %v291 = vcombine.high %v289, %v289
        %vm292 = vcmask 23552
        %v294 = vsel %vm292, %v288, 0
        %vm296 = vcmask 1042432
        %v297 = vsel %vm296, %v289, 0
        %v299 = vsel %vm296, %v291, 0
        %301 = vmatprep.subr.mxu0 %v299
        %302 = vmatpush1.msra.mxu0 %v297
        %303 = vmatprep.subr.mxu0 0.0
        %304 = vmatpush1.msra.mxu0 0.0
        %305 = vmatprep.subr.mxu0 0.0
        %306 = vmatpush1.msra.mxu0 0.0
        %307 = vmatprep.subr.mxu0 0.0
        %308 = vmatpush1.msra.mxu0 0.0
        %309 = vmatprep.subr.mxu0 0.0
        %310 = vmatpush1.msra.mxu0 0.0
        %311 = vmatprep.subr.mxu0 0.0
        %312 = vmatpush1.msra.mxu0 0.0
        %313 = vmatprep.subr.mxu0 0.0
        %314 = vmatpush1.msra.mxu0 0.0
        %315 = vmatprep.subr.mxu0 0.0
        %316 = vmatpush1.msra.mxu0 0.0
        %317 = vmatprep.subr.mxu0 0.0
        %318 = vmatpush1.msra.mxu0 0.0
        %319 = vmatprep.subr.mxu0 0.0
        %320 = vmatpush1.msra.mxu0 0.0
        %321 = vmatprep.subr.mxu0 0.0
        %322 = vmatpush1.msra.mxu0 0.0
        %323 = vmatprep.subr.mxu0 0.0
        %324 = vmatpush1.msra.mxu0 0.0
        %325 = vmatprep.subr.mxu0 0.0
        %326 = vmatpush1.msra.mxu0 0.0
        %327 = vmatprep.subr.mxu0 0.0
        %328 = vmatpush1.msra.mxu0 0.0
        %329 = vmatprep.subr.mxu0 0.0
        %330 = vmatpush1.msra.mxu0 0.0
        %331 = vmatprep.subr.mxu0 0.0
        %332 = vmatpush1.msra.mxu0 0.0
        %333 = vmatprep.subr.mxu0 0.0
        %334 = vmatpush1.msra.mxu0 0.0
        %335 = vmatprep.subr.mxu0 0.0
        %336 = vmatpush1.msra.mxu0 0.0
        %337 = vmatprep.subr.mxu0 0.0
        %338 = vmatpush1.msra.mxu0 0.0
        %339 = vmatprep.subr.mxu0 0.0
        %340 = vmatpush1.msra.mxu0 0.0
        %341 = vmatprep.subr.mxu0 0.0
        %342 = vmatpush1.msra.mxu0 0.0
        %343 = vmatprep.subr.mxu0 0.0
        %344 = vmatpush1.msra.mxu0 0.0
        %345 = vmatprep.subr.mxu0 0.0
        %346 = vmatpush1.msra.mxu0 0.0
        %347 = vmatprep.subr.mxu0 0.0
        %348 = vmatpush1.msra.mxu0 0.0
        %349 = vmatprep.subr.mxu0 0.0
        %350 = vmatpush1.msra.mxu0 0.0
        %351 = vmatprep.subr.mxu0 0.0
        %352 = vmatpush1.msra.mxu0 0.0
        %353 = vmatprep.subr.mxu0 0.0
        %354 = vmatpush1.msra.mxu0 0.0
        %355 = vmatprep.subr.mxu0 0.0
        %356 = vmatpush1.msra.mxu0 0.0
        %357 = vmatprep.subr.mxu0 0.0
        %358 = vmatpush1.msra.mxu0 0.0
        %359 = vmatprep.subr.mxu0 0.0
        %360 = vmatpush1.msra.mxu0 0.0
        %361 = vmatprep.subr.mxu0 0.0
        %362 = vmatpush1.msra.mxu0 0.0
        %363 = vmatprep.subr.mxu0 0.0
        %364 = vmatpush1.msra.mxu0 0.0
        %365 = vmatprep.mubr.f32.mxu0 0.0
        %366 = vmatmul.mubr.f32.gmra.mrb[0].mxu0 %v294
        %v367 = vpop.f32.mrb[0].mxu0
        %v368 = vadd.f32 0.0, %v367
        %v369 = vpop.f32.mrb[0].mxu0
        %v370 = vadd.f32 0.0, %v369
        %371 = vdwg.mxu0
        %v372 = vadd.f32 %v281, %v368
        %v373 = vadd.f32 %v285, %v370
        %v374 = vld [vmem:[#allocation2] sm:$0xff]
        %v375 = vld [vmem:[#allocation2 + $0x8] sm:$0xff]
        %v376 = vld [vmem:[#allocation2 + $0x10] sm:$0xff]
        %v377 = vld [vmem:[#allocation2 + $0x18] sm:$0xff]
        %v378 = vld [vmem:[#allocation2 + $0x20] sm:$0xff]
        %v379 = vld [vmem:[#allocation2 + $0x28] sm:$0xff]
        %v380 = vld [vmem:[#allocation2 + $0x30] sm:$0xff]
        %v381 = vld [vmem:[#allocation2 + $0x38] sm:$0xff]
        %v382 = vld [vmem:[#allocation2 + $0x40] sm:$0xff]
        %v383 = vld [vmem:[#allocation2 + $0x48] sm:$0xff]
        %v384 = vld [vmem:[#allocation2 + $0x50] sm:$0x1f]
        %v385 = vld [vmem:[#allocation2 + $0x58] sm:$0x1f]
        %vm386 = vcmask 367616
        %v388 = vsel %vm386, %v275, 0
        %vm390 = vcmask 1044480
        %v392 = vsel %vm390, %v384, 0
        %v395 = vsel %vm390, %v385, 0
        %397 = vmatprep.subr.mxu0 %v375
        %398 = vmatpush1.msra.mxu0 %v374
        %399 = vmatprep.subr.mxu0 %v377
        %400 = vmatpush1.msra.mxu0 %v376
        %401 = vmatprep.subr.mxu0 %v379
        %402 = vmatpush1.msra.mxu0 %v378
        %403 = vmatprep.subr.mxu0 %v381
        %404 = vmatpush1.msra.mxu0 %v380
        %405 = vmatprep.subr.mxu0 %v383
        %406 = vmatpush1.msra.mxu0 %v382
        %407 = vmatprep.subr.mxu0 %v395
        %408 = vmatpush1.msra.mxu0 %v392
        %409 = vmatprep.subr.mxu0 0.0
        %410 = vmatpush1.msra.mxu0 0.0
        %411 = vmatprep.subr.mxu0 0.0
        %412 = vmatpush1.msra.mxu0 0.0
        %413 = vmatprep.subr.mxu0 0.0
        %414 = vmatpush1.msra.mxu0 0.0
        %415 = vmatprep.subr.mxu0 0.0
        %416 = vmatpush1.msra.mxu0 0.0
        %417 = vmatprep.subr.mxu0 0.0
        %418 = vmatpush1.msra.mxu0 0.0
        %419 = vmatprep.subr.mxu0 0.0
        %420 = vmatpush1.msra.mxu0 0.0
        %421 = vmatprep.subr.mxu0 0.0
        %422 = vmatpush1.msra.mxu0 0.0
        %423 = vmatprep.subr.mxu0 0.0
        %424 = vmatpush1.msra.mxu0 0.0
        %425 = vmatprep.subr.mxu0 0.0
        %426 = vmatpush1.msra.mxu0 0.0
        %427 = vmatprep.subr.mxu0 0.0
        %428 = vmatpush1.msra.mxu0 0.0
        %429 = vmatprep.subr.mxu0 0.0
        %430 = vmatpush1.msra.mxu0 0.0
        %431 = vmatprep.subr.mxu0 0.0
        %432 = vmatpush1.msra.mxu0 0.0
        %433 = vmatprep.subr.mxu0 0.0
        %434 = vmatpush1.msra.mxu0 0.0
        %435 = vmatprep.subr.mxu0 0.0
        %436 = vmatpush1.msra.mxu0 0.0
        %437 = vmatprep.subr.mxu0 0.0
        %438 = vmatpush1.msra.mxu0 0.0
        %439 = vmatprep.subr.mxu0 0.0
        %440 = vmatpush1.msra.mxu0 0.0
        %441 = vmatprep.subr.mxu0 0.0
        %442 = vmatpush1.msra.mxu0 0.0
        %443 = vmatprep.subr.mxu0 0.0
        %444 = vmatpush1.msra.mxu0 0.0
        %445 = vmatprep.subr.mxu0 0.0
        %446 = vmatpush1.msra.mxu0 0.0
        %447 = vmatprep.subr.mxu0 0.0
        %448 = vmatpush1.msra.mxu0 0.0
        %449 = vmatprep.subr.mxu0 0.0
        %450 = vmatpush1.msra.mxu0 0.0
        %451 = vmatprep.subr.mxu0 0.0
        %452 = vmatpush1.msra.mxu0 0.0
        %453 = vmatprep.subr.mxu0 0.0
        %454 = vmatpush1.msra.mxu0 0.0
        %455 = vmatprep.subr.mxu0 0.0
        %456 = vmatpush1.msra.mxu0 0.0
        %457 = vmatprep.subr.mxu0 0.0
        %458 = vmatpush1.msra.mxu0 0.0
        %459 = vmatprep.subr.mxu0 0.0
        %460 = vmatpush1.msra.mxu0 0.0
        %461 = vmatprep.mubr.f32.mxu0 0.0
        %462 = vmatmul.mubr.f32.gmra.mrb[0].mxu0 %v388
        %v463 = vpop.f32.mrb[0].mxu0
        %v464 = vadd.f32 0.0, %v463
        %v465 = vpop.f32.mrb[0].mxu0
        %v466 = vadd.f32 0.0, %v465
        %467 = vdwg.mxu0
        %v468 = vadd.f32 %v372, %v464
        %v469 = vadd.f32 %v373, %v466
        %470 = vst [vmem:[%s243] sm:$0xff] %v468
        %vm471 = vcmask 785408
        %472 = vst.msk [vmem:[%s243 + $0x8] sm:$0xff] %vm471, %v469
        %s473 = sand.u32 %s143, 1
        %s474 = scalar_lea.sflag [#allocation4], %s473
        %s475 = sand.u32 %s143, 1
        %s476 = smul.addr %s475, 16
        %s477 = scalar_lea.vmem [#allocation5], %s476
        // Predicated region
        $region45: #{tpu_custom_call.1} parent=39 // pred_check
          %p478 = pneg %p153
        $region46: #{tpu_custom_call.1} parent=39 // pred_check_branch
          %480 = sbr.rel (%p478) target = $region48
        $region47: #{tpu_custom_call.1} parent=39 // pred_region
          %s482 = ssub.s32 256, 256
          %483 = vsyncadd %s474, %s482
          %s484 = smul.addr %s20, 2
          %s485 = smul.addr %s484, 128
          %s486 = scalar_lea.hbm %s5, %s485
          %s488 = sshll.u32 %s477, 4
          %s489 = int_to_ptr.vmem [resolvable:$true] %s488
          %491 = dma.vmem_to_hbm [thread:$0]  %s489, 256, %s486, %s474
        $region48: #{tpu_custom_call.1} parent=39 // pred_fallthru
          _
      $region40: #{tpu_custom_call.1} parent=5 // pred_fallthru
        _
      %p492 = scmp.le.s32.totalorder 2, %s15
      // Predicated region
      $region49: #{tpu_custom_call.1} parent=5 // pred_check
        %p493 = pneg %p492
      $region50: #{tpu_custom_call.1} parent=5 // pred_check_branch
        %495 = sbr.rel (%p493) target = $region52
      $region51: #{tpu_custom_call.1} parent=5 // pred_region
        %s496 = ssub.s32 %s15, 2
        // Predicated region
        $region53: #{tpu_custom_call.1} parent=51 // pred_check
          %p497 = pneg %p159
        $region54: #{tpu_custom_call.1} parent=51 // pred_check_branch
          %499 = sbr.rel (%p497) target = $region56
        $region55: #{tpu_custom_call.1} parent=51 // pred_region
          %s500 = sand.u32 %s144, 1
          %s501 = scalar_lea.sflag [#allocation4], %s500
          %s502 = sand.u32 %s144, 1
          %s503 = smul.addr %s502, 16
          %s504 = scalar_lea.vmem [#allocation5], %s503
          %505 = dma.done %s501, 256
        $region56: #{tpu_custom_call.1} parent=51 // pred_fallthru
          _
      $region52: #{tpu_custom_call.1} parent=5 // pred_fallthru
        _
    $region6: #{tpu_custom_call.1} parent=1 // loop_footer
      %s19 = sadd.s32 1, %s15
    $region7: #{tpu_custom_call.1} parent=1 // loop_footer_branch
      %14 = sbr.rel target = $region3
    $region8: #{tpu_custom_call.1} parent=1 // loop_exit
      _
    %506 = vsyncpa [#allocation3], 1
    %s507 = scalar_lea.sflag [#allocation3], 1
    %508 = vsyncpa %s507, 1
    %509 = vsyncpa [#allocation4], 1
    %s510 = scalar_lea.sflag [#allocation4], 1
    %511 = vsyncpa %s510, 1

</llo_original>
